<compile_context>
chip_gen: v7x
topology: tpu7x:2x2x1
jax: 0.10.0
libtpu: 0.0.40
codegen_flags: <defaults>
</compile_context>

<pallas_src>
import jax
import jax.numpy as jnp
from jax.experimental import pallas as pl
from jax.experimental.pallas import tpu as pltpu

HIDDEN = 64            # hidden_channels
NUM_NODE_FEATURES = 9  # MoleculeNet ESOL node feature dim
NUM_LAYERS = 4


def _round_up(v, m):
    return ((v + m - 1) // m) * m


def _pick_row_tile(n_pad):
    for t in (512, 256, 128):
        if n_pad % t == 0:
            return t
    return n_pad


def gnn_kernel(x_ref, a_ref, drow_ref, dcol_ref, p_ref, w_ref, b_ref,
               out_ref, h_a, h_b, hw_ref):
    """Grid = (layer, A_hat row tile). All matmuls feed the MXU in bf16."""
    l = pl.program_id(0)                 # layer index (sequential)
    i = pl.program_id(1)                 # row-tile index within the layer
    tm = a_ref.shape[0]
    parity = l % 2
    is_last_layer = l == NUM_LAYERS - 1

    # Initialize the "ping" activation buffer with the padded node features.
    @pl.when(jnp.logical_and(l == 0, i == 0))
    def _():
        h_a[...] = x_ref[...]

    # Once per layer: HW = H @ W_l  (H is small: [n_pad, HIDDEN], resident).
    @pl.when(i == 0)
    def _():
        h_in = jnp.where(parity == 0, h_a[...], h_b[...])
        hw = jnp.dot(h_in, w_ref[0], preferred_element_type=jnp.float32)
        hw_ref[...] = hw.astype(jnp.bfloat16)

    # Symmetric GCN normalization applied on the fly to the streamed row tile:
    # A_hat[i, :] = d_row[i] * (A + I)[i, :] * d_col   (VPU, overlaps MXU).
    a_hat = (drow_ref[...] * a_ref[...] * dcol_ref[...]).astype(jnp.bfloat16)
    agg = jnp.dot(a_hat, hw_ref[...], preferred_element_type=jnp.float32)

    # Mask padded node rows so relu(bias) never leaks into later layers.
    mask = (drow_ref[...] > 0.0).astype(jnp.float32)
    h_new = (jnp.maximum(agg + b_ref[0], 0.0) * mask).astype(jnp.bfloat16)

    row0 = pl.multiple_of(i * tm, tm)

    @pl.when(parity == 0)
    def _():
        h_b[pl.ds(row0, tm), :] = h_new

    @pl.when(parity == 1)
    def _():
        h_a[pl.ds(row0, tm), :] = h_new

    # global_mean_pool fused into the last layer: pooled += P[:, tile] @ H4_tile
    @pl.when(jnp.logical_and(is_last_layer, i == 0))
    def _():
        out_ref[...] = jnp.zeros_like(out_ref)

    @pl.when(is_last_layer)
    def _():
        out_ref[...] += jnp.dot(p_ref[...], h_new,
                                preferred_element_type=jnp.float32)


def preprocess(x, edge_index, batch, num_graphs):
    """Build padded bf16 graph operators (no f32 NxN array is materialized)."""
    num_nodes = x.shape[0]
    n_pad = max(128, _round_up(num_nodes, 128))
    g_pad = max(8, _round_up(num_graphs, 8))

    src = edge_index[0]
    dst = edge_index[1]
    diag = jnp.arange(num_nodes)

    # A + I (un-normalized), built directly in bf16 at the padded size.
    a = jnp.zeros((n_pad, n_pad), jnp.bfloat16)
    a = a.at[dst, src].set(jnp.bfloat16(1.0))    # message src -> dst
    a = a.at[diag, diag].set(jnp.bfloat16(1.0))  # self loops

    # Degrees via O(E) scatter-add (exact, f32); D^{-1/2} vectors.
    deg = jnp.zeros((n_pad,), jnp.float32)
    deg = deg.at[dst].add(1.0)
    deg = deg.at[diag].add(1.0)
    d_inv_sqrt = jnp.where(deg > 0, jax.lax.rsqrt(jnp.maximum(deg, 1.0)), 0.0)
    d_row = d_inv_sqrt[:, None]                  # [n_pad, 1]  f32
    d_col = d_inv_sqrt[None, :]                  # [1, n_pad]  f32

    # Mean-pool matrix; padded nodes get graph id -1 => all-zero columns.
    batch_p = jnp.full((n_pad,), -1, jnp.int32).at[:num_nodes].set(batch)
    one_hot = (batch_p[None, :] == jnp.arange(g_pad)[:, None]).astype(jnp.float32)
    counts = one_hot.sum(axis=1, keepdims=True)
    pool = (one_hot / jnp.maximum(counts, 1.0)).astype(jnp.bfloat16)  # [g_pad, n_pad]

    # Node features zero-padded to [n_pad, HIDDEN] (feature dim padded too so
    # W1 can be stacked with W2..W4).
    x_p = jnp.zeros((n_pad, HIDDEN), jnp.bfloat16)
    x_p = x_p.at[:num_nodes, :x.shape[1]].set(x.astype(jnp.bfloat16))
    return x_p, a, d_row, d_col, pool, n_pad, g_pad


def stack_params(params):
    w1, b1, w2, b2, w3, b3, w4, b4, wo, bo = params
    w1p = jnp.zeros((HIDDEN, HIDDEN), jnp.float32).at[:w1.shape[0], :].set(w1)
    w_stack = jnp.stack([w1p, w2, w3, w4]).astype(jnp.bfloat16)   # [4, H, H]
    b_stack = jnp.stack([b1, b2, b3, b4]).astype(jnp.float32)     # [4, 1, H]
    return w_stack, b_stack, wo, bo


def gnn_forward(x, edge_index, batch, params, num_graphs):
    x_p, a, d_row, d_col, pool, n_pad, g_pad = preprocess(
        x, edge_index, batch, num_graphs)
    w_stack, b_stack, wo, bo = stack_params(params)

    tm = _pick_row_tile(n_pad)
    n_tiles = n_pad // tm

    pooled = pl.pallas_call(
        gnn_kernel,
        out_shape=jax.ShapeDtypeStruct((g_pad, HIDDEN), jnp.float32),
        grid_spec=pltpu.PrefetchScalarGridSpec(
            num_scalar_prefetch=0,
            grid=(NUM_LAYERS, n_tiles),
            in_specs=[
                pl.BlockSpec((n_pad, HIDDEN), lambda l, i: (0, 0)),        # x (resident)
                pl.BlockSpec((tm, n_pad), lambda l, i: (i, 0)),            # A+I row tile (streamed)
                pl.BlockSpec((tm, 1), lambda l, i: (i, 0)),                # d_row tile
                pl.BlockSpec((1, n_pad), lambda l, i: (0, 0)),             # d_col (resident)
                pl.BlockSpec((g_pad, tm), lambda l, i: (0, i)),            # pool column tile
                pl.BlockSpec((1, HIDDEN, HIDDEN), lambda l, i: (l, 0, 0)), # W_l
                pl.BlockSpec((1, 1, HIDDEN), lambda l, i: (l, 0, 0)),      # b_l
            ],
            out_specs=pl.BlockSpec((g_pad, HIDDEN), lambda l, i: (0, 0)),
            scratch_shapes=[
                pltpu.VMEM((n_pad, HIDDEN), jnp.bfloat16),   # H ping
                pltpu.VMEM((n_pad, HIDDEN), jnp.bfloat16),   # H pong
                pltpu.VMEM((n_pad, HIDDEN), jnp.bfloat16),   # H @ W_l
            ],
        ),
        compiler_params=pltpu.CompilerParams(
            # layer axis is a true dependence chain; row axis carries VMEM
            # scratch state across steps, so both must stay "arbitrary".
            dimension_semantics=("arbitrary", "arbitrary"),
            vmem_limit_bytes=48 * 1024 * 1024,
        ),
    )(x_p, a, d_row, d_col, pool, w_stack, b_stack)

    pooled = pooled[:num_graphs]                 # [G, HIDDEN] f32, lane-dense
    return pooled @ wo + bo                      # hidden -> 1 Linear (trivial, XLA)


# --------------------------- references ------------------------------------

def gnn_reference_matched(x, edge_index, batch, params, num_graphs):
    """Pure-JAX reference with the SAME bf16 casts as the kernel."""
    x_p, a, d_row, d_col, pool, _, _ = preprocess(x, edge_index, batch, num_graphs)
    w_stack, b_stack, wo, bo = stack_params(params)
    a_hat = (d_row * a * d_col).astype(jnp.bfloat16)
    mask = (d_row > 0.0).astype(jnp.float32)
    h = x_p
    for l in range(NUM_LAYERS):
        hw = jnp.dot(h, w_stack[l], preferred_element_type=jnp.float32).astype(jnp.bfloat16)
        agg = jnp.dot(a_hat, hw, preferred_element_type=jnp.float32)
        h = (jnp.maximum(agg + b_stack[l], 0.0) * mask).astype(jnp.bfloat16)
    pooled = jnp.dot(pool, h, preferred_element_type=jnp.float32)[:num_graphs]
    return pooled @ wo + bo


def gnn_reference_f32(x, edge_index, batch, params, num_graphs):
    """Full-f32 reference of the original module's forward pass."""
    num_nodes = x.shape[0]
    src, dst = edge_index[0], edge_index[1]
    diag = jnp.arange(num_nodes)
    a = jnp.zeros((num_nodes, num_nodes), jnp.float32)
    a = a.at[dst, src].set(1.0)
    a = a.at[diag, diag].set(1.0)
    deg = a.sum(axis=1)
    dis = jnp.where(deg > 0, 1.0 / jnp.sqrt(deg), 0.0)
    a_hat = dis[:, None] * a * dis[None, :]
    one_hot = (batch[None, :] == jnp.arange(num_graphs)[:, None]).astype(jnp.float32)
    pool = one_hot / jnp.maximum(one_hot.sum(axis=1, keepdims=True), 1.0)
    w1, b1, w2, b2, w3, b3, w4, b4, wo, bo = params
    h = x.astype(jnp.float32)
    for w, b in ((w1, b1), (w2, b2), (w3, b3), (w4, b4)):
        h = jnp.maximum(a_hat @ (h @ w) + b, 0.0)
    return (pool @ h) @ wo + bo


def init_params(key):
    ks = jax.random.split(key, 10)

    def lin(k, fan_in, fan_out):
        w = jax.random.normal(k, (fan_in, fan_out), jnp.float32) * 0.1
        b = jnp.zeros((1, fan_out), jnp.float32)
        return w, b

    w1, b1 = lin(ks[0], NUM_NODE_FEATURES, HIDDEN)
    w2, b2 = lin(ks[1], HIDDEN, HIDDEN)
    w3, b3 = lin(ks[2], HIDDEN, HIDDEN)
    w4, b4 = lin(ks[3], HIDDEN, HIDDEN)
    wo, bo = lin(ks[4], HIDDEN, 1)
    return (w1, b1, w2, b2, w3, b3, w4, b4, wo, bo)


if __name__ == "__main__":
    key = jax.random.PRNGKey(0)
    k_x, k_p = jax.random.split(key)

    # Two small molecular graphs: 10 nodes each, chain topology (both directions).
    num_nodes, num_graphs = 20, 2
    x = jax.random.normal(k_x, (num_nodes, NUM_NODE_FEATURES), jnp.float32)

    def chain_edges(offset, n):
        s = jnp.arange(offset, offset + n - 1)
        d = s + 1
        return jnp.concatenate([s, d]), jnp.concatenate([d, s])

    s0, d0 = chain_edges(0, 10)
    s1, d1 = chain_edges(10, 10)
    edge_index = jnp.stack([jnp.concatenate([s0, s1]),
                            jnp.concatenate([d0, d1])]).astype(jnp.int32)
    batch = jnp.concatenate([jnp.zeros(10, jnp.int32), jnp.ones(10, jnp.int32)])

    params = init_params(k_p)

    out = gnn_forward(x, edge_index, batch, params, num_graphs)
    out = jax.block_until_ready(out)

    ref_m = gnn_reference_matched(x, edge_index, batch, params, num_graphs)
    ref_f = gnn_reference_f32(x, edge_index, batch, params, num_graphs)

    assert out.shape == (num_graphs, 1)
    # Tight check against a precision-matched (bf16-input) reference.
    assert jnp.allclose(out, ref_m, atol=2e-3, rtol=2e-3), (out, ref_m)
    # Loose check against the original full-f32 semantics.
    assert jnp.allclose(out, ref_f, atol=5e-2, rtol=5e-2), (out, ref_f)

    print("KERNEL_OK")
</pallas_src>

<mosaic_0001>
module attributes {stable_mosaic.version = 11 : i64} {
  func.func @gnn_kernel(%arg0: i32, %arg1: i32, %arg2: memref<128x64xbf16, #tpu.memory_space<vmem>>, %arg3: memref<128x128xbf16, #tpu.memory_space<vmem>>, %arg4: memref<128x1xf32, #tpu.memory_space<vmem>>, %arg5: memref<1x128xf32, #tpu.memory_space<vmem>>, %arg6: memref<8x128xbf16, #tpu.memory_space<vmem>>, %arg7: memref<1x64x64xbf16, #tpu.memory_space<vmem>>, %arg8: memref<1x1x64xf32, #tpu.memory_space<vmem>>, %arg9: memref<8x64xf32, #tpu.memory_space<vmem>>, %arg10: memref<128x64xbf16, #tpu.memory_space<vmem>>, %arg11: memref<128x64xbf16, #tpu.memory_space<vmem>>, %arg12: memref<128x64xbf16, #tpu.memory_space<vmem>>) attributes {dimension_semantics = [#tpu.dimension_semantics<arbitrary>, #tpu.dimension_semantics<arbitrary>], iteration_bounds = array<i64: 4, 1>, scalar_prefetch = 0 : i64, scratch_operands = 3 : i64, tpu.core_type = #tpu.core_type<tc>, window_params = [{pipeline_mode = #tpu.pipeline_mode<synchronous>, transform_indices = @transform_0, window_bounds = array<i64: 128, 64>}, {transform_indices = @transform_1, window_bounds = array<i64: 128, 128>}, {transform_indices = @transform_2, window_bounds = array<i64: 128, 1>}, {pipeline_mode = #tpu.pipeline_mode<synchronous>, transform_indices = @transform_3, window_bounds = array<i64: 1, 128>}, {transform_indices = @transform_4, window_bounds = array<i64: 8, 128>}, {transform_indices = @transform_5, window_bounds = array<i64: 1, 64, 64>}, {transform_indices = @transform_6, window_bounds = array<i64: 1, 1, 64>}, {pipeline_mode = #tpu.pipeline_mode<synchronous>, transform_indices = @transform_7, window_bounds = array<i64: 8, 64>}]} {
    %c2_i32 = arith.constant 2 : i32
    %c0_i32 = arith.constant 0 : i32
    %0 = arith.cmpi eq, %c2_i32, %c0_i32 : i32
    %c1_i32 = arith.constant 1 : i32
    %1 = arith.select %0, %c1_i32, %c2_i32 : i32
    %2 = arith.remsi %arg0, %1 : i32
    %c0_i32_0 = arith.constant 0 : i32
    %3 = arith.cmpi ne, %2, %c0_i32_0 : i32
    %c0_i32_1 = arith.constant 0 : i32
    %4 = arith.cmpi slt, %2, %c0_i32_1 : i32
    %c0_i32_2 = arith.constant 0 : i32
    %5 = arith.cmpi slt, %1, %c0_i32_2 : i32
    %6 = arith.xori %4, %5 : i1
    %7 = arith.andi %6, %3 : i1
    %8 = arith.addi %2, %1 : i32
    %9 = arith.select %7, %8, %2 : i32
    %c3_i32 = arith.constant 3 : i32
    %10 = arith.cmpi eq, %arg0, %c3_i32 : i32
    %c0_i32_3 = arith.constant 0 : i32
    %11 = arith.cmpi eq, %arg0, %c0_i32_3 : i32
    %c0_i32_4 = arith.constant 0 : i32
    %12 = arith.cmpi eq, %arg1, %c0_i32_4 : i32
    %13 = arith.andi %11, %12 : i1
    %14 = arith.extui %13 : i1 to i32
    %c0_i32_5 = arith.constant 0 : i32
    %15 = arith.cmpi ne, %14, %c0_i32_5 : i32
    scf.if %15 {
      %c0_29 = arith.constant 0 : index
      %c0_30 = arith.constant 0 : index
      %58 = vector.load %arg2[%c0_29, %c0_30] : memref<128x64xbf16, #tpu.memory_space<vmem>>, vector<128x64xbf16>
      %c0_31 = arith.constant 0 : index
      %c0_32 = arith.constant 0 : index
      %59 = vector.load %arg10[%c0_31, %c0_32] : memref<128x64xbf16, #tpu.memory_space<vmem>>, vector<128x64xbf16>
      tpu.vector_store %arg10[%c0_31, %c0_32], %58 {strides = array<i32>} : memref<128x64xbf16, #tpu.memory_space<vmem>>, vector<128x64xbf16>,
    } else {
    }
    %c0_i32_6 = arith.constant 0 : i32
    %16 = arith.cmpi eq, %arg1, %c0_i32_6 : i32
    %17 = arith.extui %16 : i1 to i32
    %c0_i32_7 = arith.constant 0 : i32
    %18 = arith.cmpi ne, %17, %c0_i32_7 : i32
    scf.if %18 {
      %c0_i32_29 = arith.constant 0 : i32
      %58 = arith.cmpi eq, %9, %c0_i32_29 : i32
      %c0_30 = arith.constant 0 : index
      %c0_31 = arith.constant 0 : index
      %59 = vector.load %arg10[%c0_30, %c0_31] : memref<128x64xbf16, #tpu.memory_space<vmem>>, vector<128x64xbf16>
      %c0_32 = arith.constant 0 : index
      %c0_33 = arith.constant 0 : index
      %60 = vector.load %arg11[%c0_32, %c0_33] : memref<128x64xbf16, #tpu.memory_space<vmem>>, vector<128x64xbf16>
      %61 = arith.select %58, %59, %60 : vector<128x64xbf16>
      %c0_34 = arith.constant 0 : index
      %c0_35 = arith.constant 0 : index
      %c0_36 = arith.constant 0 : index
      %62 = vector.load %arg7[%c0_34, %c0_35, %c0_36] : memref<1x64x64xbf16, #tpu.memory_space<vmem>>, vector<1x64x64xbf16>
      %63 = vector.shape_cast %62 : vector<1x64x64xbf16> to vector<64x64xbf16>
      %cst_37 = arith.constant dense<0.000000e+00> : vector<128x64xf32>
      %64 = tpu.matmul %61, %63, %cst_37 {dimension_numbers = #tpu.dot_dimension_numbers<[1], [0], [0], [1], [0, 0, 1, 1], [], []>} : vector<128x64xbf16>, vector<64x64xbf16>, vector<128x64xf32> -> vector<128x64xf32>
      %65 = arith.truncf %64 : vector<128x64xf32> to vector<128x64xbf16>
      %c0_38 = arith.constant 0 : index
      %c0_39 = arith.constant 0 : index
      %66 = vector.load %arg12[%c0_38, %c0_39] : memref<128x64xbf16, #tpu.memory_space<vmem>>, vector<128x64xbf16>
      tpu.vector_store %arg12[%c0_38, %c0_39], %65 {strides = array<i32>} : memref<128x64xbf16, #tpu.memory_space<vmem>>, vector<128x64xbf16>,
    } else {
    }
    %c0 = arith.constant 0 : index
    %c0_8 = arith.constant 0 : index
    %19 = vector.load %arg4[%c0, %c0_8] : memref<128x1xf32, #tpu.memory_space<vmem>>, vector<128x1xf32>
    %c0_9 = arith.constant 0 : index
    %c0_10 = arith.constant 0 : index
    %20 = vector.load %arg3[%c0_9, %c0_10] : memref<128x128xbf16, #tpu.memory_space<vmem>>, vector<128x128xbf16>
    %21 = arith.extf %20 : vector<128x128xbf16> to vector<128x128xf32>
    %22 = vector.broadcast %19 : vector<128x1xf32> to vector<128x128xf32>
    %23 = arith.mulf %22, %21 : vector<128x128xf32>
    %c0_11 = arith.constant 0 : index
    %c0_12 = arith.constant 0 : index
    %24 = vector.load %arg5[%c0_11, %c0_12] : memref<1x128xf32, #tpu.memory_space<vmem>>, vector<1x128xf32>
    %25 = vector.broadcast %24 : vector<1x128xf32> to vector<128x128xf32>
    %26 = arith.mulf %23, %25 : vector<128x128xf32>
    %27 = arith.truncf %26 : vector<128x128xf32> to vector<128x128xbf16>
    %c0_13 = arith.constant 0 : index
    %c0_14 = arith.constant 0 : index
    %28 = vector.load %arg12[%c0_13, %c0_14] : memref<128x64xbf16, #tpu.memory_space<vmem>>, vector<128x64xbf16>
    %cst = arith.constant dense<0.000000e+00> : vector<128x64xf32>
    %29 = tpu.matmul %27, %28, %cst {dimension_numbers = #tpu.dot_dimension_numbers<[1], [0], [0], [1], [0, 0, 1, 1], [], []>} : vector<128x128xbf16>, vector<128x64xbf16>, vector<128x64xf32> -> vector<128x64xf32>
    %c0_15 = arith.constant 0 : index
    %c0_16 = arith.constant 0 : index
    %30 = vector.load %arg4[%c0_15, %c0_16] : memref<128x1xf32, #tpu.memory_space<vmem>>, vector<128x1xf32>
    %cst_17 = arith.constant 0.000000e+00 : f32
    %31 = vector.broadcast %cst_17 : f32 to vector<128x1xf32>
    %32 = arith.cmpf ogt, %30, %31 : vector<128x1xf32>
    %33 = arith.extui %32 : vector<128x1xi1> to vector<128x1xi32>
    %34 = arith.sitofp %33 : vector<128x1xi32> to vector<128x1xf32>
    %c0_18 = arith.constant 0 : index
    %c0_19 = arith.constant 0 : index
    %c0_20 = arith.constant 0 : index
    %35 = vector.load %arg8[%c0_18, %c0_19, %c0_20] : memref<1x1x64xf32, #tpu.memory_space<vmem>>, vector<1x1x64xf32>
    %36 = vector.shape_cast %35 : vector<1x1x64xf32> to vector<1x64xf32>
    %37 = vector.broadcast %36 : vector<1x64xf32> to vector<128x64xf32>
    %38 = arith.addf %29, %37 : vector<128x64xf32>
    %cst_21 = arith.constant 0.000000e+00 : f32
    %39 = vector.broadcast %cst_21 : f32 to vector<128x64xf32>
    %40 = arith.maximumf %38, %39 : vector<128x64xf32>
    %41 = vector.broadcast %34 : vector<128x1xf32> to vector<128x64xf32>
    %42 = arith.mulf %40, %41 : vector<128x64xf32>
    %43 = arith.truncf %42 : vector<128x64xf32> to vector<128x64xbf16>
    %c128_i32 = arith.constant 128 : i32
    %44 = arith.muli %arg1, %c128_i32 : i32
    %45 = tpu.assume_multiple %44, 128 : i32
    %c0_i32_22 = arith.constant 0 : i32
    %46 = arith.cmpi eq, %9, %c0_i32_22 : i32
    %47 = arith.extui %46 : i1 to i32
    %c0_i32_23 = arith.constant 0 : i32
    %48 = arith.cmpi ne, %47, %c0_i32_23 : i32
    scf.if %48 {
      %58 = arith.index_cast %45 : i32 to index
      %c0_29 = arith.constant 0 : index
      %59 = vector.load %arg11[%58, %c0_29] : memref<128x64xbf16, #tpu.memory_space<vmem>>, vector<128x64xbf16>
      tpu.vector_store %arg11[%58, %c0_29], %43 {strides = array<i32>} : memref<128x64xbf16, #tpu.memory_space<vmem>>, vector<128x64xbf16>,
    } else {
    }
    %c1_i32_24 = arith.constant 1 : i32
    %49 = arith.cmpi eq, %9, %c1_i32_24 : i32
    %50 = arith.extui %49 : i1 to i32
    %c0_i32_25 = arith.constant 0 : i32
    %51 = arith.cmpi ne, %50, %c0_i32_25 : i32
    scf.if %51 {
      %58 = arith.index_cast %45 : i32 to index
      %c0_29 = arith.constant 0 : index
      %59 = vector.load %arg10[%58, %c0_29] : memref<128x64xbf16, #tpu.memory_space<vmem>>, vector<128x64xbf16>
      tpu.vector_store %arg10[%58, %c0_29], %43 {strides = array<i32>} : memref<128x64xbf16, #tpu.memory_space<vmem>>, vector<128x64xbf16>,
    } else {
    }
    %c0_i32_26 = arith.constant 0 : i32
    %52 = arith.cmpi eq, %arg1, %c0_i32_26 : i32
    %53 = arith.andi %10, %52 : i1
    %54 = arith.extui %53 : i1 to i32
    %c0_i32_27 = arith.constant 0 : i32
    %55 = arith.cmpi ne, %54, %c0_i32_27 : i32
    scf.if %55 {
      %cst_29 = arith.constant 0.000000e+00 : f32
      %58 = vector.broadcast %cst_29 : f32 to vector<8x64xf32>
      %c0_30 = arith.constant 0 : index
      %c0_31 = arith.constant 0 : index
      %59 = vector.load %arg9[%c0_30, %c0_31] : memref<8x64xf32, #tpu.memory_space<vmem>>, vector<8x64xf32>
      tpu.vector_store %arg9[%c0_30, %c0_31], %58 {strides = array<i32>} : memref<8x64xf32, #tpu.memory_space<vmem>>, vector<8x64xf32>,
    } else {
    }
    %56 = arith.extui %10 : i1 to i32
    %c0_i32_28 = arith.constant 0 : i32
    %57 = arith.cmpi ne, %56, %c0_i32_28 : i32
    scf.if %57 {
      %c0_29 = arith.constant 0 : index
      %c0_30 = arith.constant 0 : index
      %58 = vector.load %arg9[%c0_29, %c0_30] : memref<8x64xf32, #tpu.memory_space<vmem>>, vector<8x64xf32>
      %c0_31 = arith.constant 0 : index
      %c0_32 = arith.constant 0 : index
      %59 = vector.load %arg6[%c0_31, %c0_32] : memref<8x128xbf16, #tpu.memory_space<vmem>>, vector<8x128xbf16>
      %cst_33 = arith.constant dense<0.000000e+00> : vector<8x64xf32>
      %60 = tpu.matmul %59, %43, %cst_33 {dimension_numbers = #tpu.dot_dimension_numbers<[1], [0], [0], [1], [0, 0, 1, 1], [], []>} : vector<8x128xbf16>, vector<128x64xbf16>, vector<8x64xf32> -> vector<8x64xf32>
      %61 = arith.addf %58, %60 : vector<8x64xf32>
      %c0_34 = arith.constant 0 : index
      %c0_35 = arith.constant 0 : index
      %62 = vector.load %arg9[%c0_34, %c0_35] : memref<8x64xf32, #tpu.memory_space<vmem>>, vector<8x64xf32>
      tpu.vector_store %arg9[%c0_34, %c0_35], %61 {strides = array<i32>} : memref<8x64xf32, #tpu.memory_space<vmem>>, vector<8x64xf32>,
    } else {
    }
    return
  }
  func.func @transform_0(%arg0: i32, %arg1: i32) -> (i32, i32) {
    %c0_i32 = arith.constant 0 : i32
    %c0_i32_0 = arith.constant 0 : i32
    %c0_i32_1 = arith.constant 0 : i32
    return %c0_i32, %c0_i32_0 : i32, i32
  }
  func.func @transform_1(%arg0: i32, %arg1: i32) -> (i32, i32) {
    %c0_i32 = arith.constant 0 : i32
    %c0_i32_0 = arith.constant 0 : i32
    return %arg1, %c0_i32 : i32, i32
  }
  func.func @transform_2(%arg0: i32, %arg1: i32) -> (i32, i32) {
    %c0_i32 = arith.constant 0 : i32
    %c0_i32_0 = arith.constant 0 : i32
    return %arg1, %c0_i32 : i32, i32
  }
  func.func @transform_3(%arg0: i32, %arg1: i32) -> (i32, i32) {
    %c0_i32 = arith.constant 0 : i32
    %c0_i32_0 = arith.constant 0 : i32
    %c0_i32_1 = arith.constant 0 : i32
    return %c0_i32, %c0_i32_0 : i32, i32
  }
  func.func @transform_4(%arg0: i32, %arg1: i32) -> (i32, i32) {
    %c0_i32 = arith.constant 0 : i32
    %c0_i32_0 = arith.constant 0 : i32
    return %c0_i32, %arg1 : i32, i32
  }
  func.func @transform_5(%arg0: i32, %arg1: i32) -> (i32, i32, i32) {
    %c0_i32 = arith.constant 0 : i32
    %c0_i32_0 = arith.constant 0 : i32
    %c0_i32_1 = arith.constant 0 : i32
    return %arg0, %c0_i32, %c0_i32_0 : i32, i32, i32
  }
  func.func @transform_6(%arg0: i32, %arg1: i32) -> (i32, i32, i32) {
    %c0_i32 = arith.constant 0 : i32
    %c0_i32_0 = arith.constant 0 : i32
    %c0_i32_1 = arith.constant 0 : i32
    return %arg0, %c0_i32, %c0_i32_0 : i32, i32, i32
  }
  func.func @transform_7(%arg0: i32, %arg1: i32) -> (i32, i32) {
    %c0_i32 = arith.constant 0 : i32
    %c0_i32_0 = arith.constant 0 : i32
    %c0_i32_1 = arith.constant 0 : i32
    return %c0_i32, %c0_i32_0 : i32, i32
  }
}

</mosaic_0001>

<llo_original>
// kernel: tpu_custom_call.1
$region0: #{tpu_custom_call.1}
  #allocation0 [shape = 'u32[]', space=smem, size = 0x4, offset = 0x4, fixed_abs, tag = 'smem constant byte address 0x4 - core index']
  #allocation1 [shape = 'u32[144,128]{1,0:T(1,128)}', space=vmem, size = 0x12000, scoped, tag = 'internal scratch']
  #allocation2 [shape = 'bf16[128,64]{1,0:T(16,128)(2,1)}', space=vmem, size = 0x8000, scoped, tag = 'scratch operand']
  #allocation3 [shape = 'bf16[128,64]{1,0:T(16,128)(2,1)}', space=vmem, size = 0x8000, scoped, tag = 'scratch operand']
  #allocation4 [shape = 'bf16[128,64]{1,0:T(16,128)(2,1)}', space=vmem, size = 0x8000, scoped, tag = 'scratch operand']
  %s0 = inlined_call_operand.vmem [shape: bf16[128,64], index: 0, kind: input, shape index: {}]
  %s1 = inlined_call_operand.vmem [shape: bf16[128,128], index: 1, kind: input, shape index: {}]
  %s2 = inlined_call_operand.vmem [shape: f32[128,1], index: 2, kind: input, shape index: {}]
  %s3 = inlined_call_operand.vmem [shape: f32[1,128], index: 3, kind: input, shape index: {}]
  %s4 = inlined_call_operand.vmem [shape: bf16[8,128], index: 4, kind: input, shape index: {}]
  %s5 = inlined_call_operand.vmem [shape: bf16[4,64,64], index: 5, kind: input, shape index: {}]
  %s6 = inlined_call_operand.vmem [shape: f32[4,1,64], index: 6, kind: input, shape index: {}]
  %s7 = inlined_call_operand.hbm [shape: f32[8,64], index: 7, kind: output, shape index: {}]
  %s8 = sld [smem:[#allocation0]]
  $region85: #{tpu_custom_call.1} parent=0
    _
  %s10 = ssub.s32 1, %s8
  %s11 = scalar_select 0, %s10, %s8
  $region1: #{tpu_custom_call.1} parent=0
    #allocation5 [shape = 'u8[4096]{0}', space=vmem, size = 0x1000, scoped, tag = 'output window, operand 0, single buffered']
    #allocation6 [shape = 's32[2]{0}', space=sflag, size = 0x8, scoped, tag = 'scoped memory for tpu_custom_call.1']
    %12 = vsyncpa [#allocation6], 0
    loop: start=0, step=1, limit=6
    $region2: #{tpu_custom_call.1} parent=1 // loop_pre_header
      _
    $region3: #{tpu_custom_call.1} parent=1 // loop_header
      %s14 = sphi 0, %s18
      %p15 = scmp.ge.s32.totalorder %s14, 6
      %s21 = sphi 0, %s33
      %s22 = sphi 0, %s29
      %s23 = sphi 0, %s21
      %s24 = sphi 0, %s22
      %s25 = sphi 0, %s23
      %s26 = sphi 0, %s24
      %s34 = sphi 0, %s34
      %s36 = sphi 0, %s34
      %s37 = sphi 0, %s36
      %s51 = sphi 0, %s37
      %s57 = sphi 0, %s59
      %s60 = sphi 0, %s57
      %s61 = sphi 0, %s60
      %s77 = sphi 0, %s61
      %s83 = sphi 0, %s85
      %s86 = sphi 0, %s83
      %s87 = sphi 0, %s86
      %s103 = sphi 0, %s87
      %s107 = sphi 0, %s107
      %s109 = sphi 0, %s107
      %s110 = sphi 0, %s109
      %s124 = sphi 0, %s110
      %s130 = sphi 0, %s132
      %s133 = sphi 0, %s130
      %s134 = sphi 0, %s133
      %s150 = sphi 0, %s134
      %s156 = sphi 0, %s158
      %s159 = sphi 0, %s156
      %s160 = sphi 0, %s159
      %s176 = sphi 0, %s160
      %s182 = sphi 0, %s184
      %s185 = sphi 0, %s182
      %s186 = sphi 0, %s185
      %s202 = sphi 0, %s186
      %s206 = sphi 0, %s206
      %s208 = sphi 0, %s206
      %s209 = sphi 0, %s208
      %s223 = sphi 0, %s209
    $region4: #{tpu_custom_call.1} parent=1 // loop_header_branch
      %17 = sbr.rel (%p15) target = $region8
    $region5: #{tpu_custom_call.1} parent=1 // loop_body
      %s19 = ssub.s32 %s14, 1
      %s20 = ssub.s32 %s14, 2
      %s27 = sadd.s32 1, %s22
      %p28 = scmp.ge.s32.totalorder %s27, 1
      %s29 = scalar_select %p28, 0, %s27
      %s30 = sadd.s32 1, %s21
      %s31 = scalar_select %p28, %s30, %s21
      %p32 = scmp.ge.s32.totalorder %s31, 4
      %s33 = scalar_select %p32, 0, %s31
      %s35 = sadd.s32 %s34, 1
      %p38 = scmp.eq.s32.totalorder %s14, 3
      %p39 = scmp.ne.s32.totalorder %s34, %s36
      %p40 = scmp.eq.s32.totalorder %s14, 0
      %p41 = por %p39, %p40
      %p42 = scmp.ne.s32.totalorder %s34, %s36
      %p43 = scmp.eq.s32.totalorder %s19, 3
      %p44 = por %p42, %p43
      %p45 = scmp.ne.s32.totalorder %s36, %s37
      %p46 = scmp.eq.s32.totalorder %s19, 0
      %p47 = por %p45, %p46
      %p48 = scmp.ne.s32.totalorder %s36, %s37
      %p49 = scmp.eq.s32.totalorder %s20, 3
      %p50 = por %p48, %p49
      %p52 = scmp.ne.s32.totalorder %s37, %s51
      %p53 = scmp.eq.s32.totalorder %s20, 0
      %p54 = por %p52, %p53
      %s55 = ssub.s32 %s22, %s29
      %p56 = scmp.eq.s32.totalorder %s55, 0
      %s58 = sadd.s32 %s57, 1
      %s59 = scalar_select %p56, %s57, %s58
      %p62 = pneg %p56
      %p63 = scmp.eq.s32.totalorder %s14, 3
      %p64 = por %p62, %p63
      %p65 = scmp.ne.s32.totalorder %s57, %s60
      %p66 = scmp.eq.s32.totalorder %s14, 0
      %p67 = por %p65, %p66
      %p68 = scmp.ne.s32.totalorder %s57, %s60
      %p69 = scmp.eq.s32.totalorder %s19, 3
      %p70 = por %p68, %p69
      %p71 = scmp.ne.s32.totalorder %s60, %s61
      %p72 = scmp.eq.s32.totalorder %s19, 0
      %p73 = por %p71, %p72
      %p74 = scmp.ne.s32.totalorder %s60, %s61
      %p75 = scmp.eq.s32.totalorder %s20, 3
      %p76 = por %p74, %p75
      %p78 = scmp.ne.s32.totalorder %s61, %s77
      %p79 = scmp.eq.s32.totalorder %s20, 0
      %p80 = por %p78, %p79
      %s81 = ssub.s32 %s22, %s29
      %p82 = scmp.eq.s32.totalorder %s81, 0
      %s84 = sadd.s32 %s83, 1
      %s85 = scalar_select %p82, %s83, %s84
      %p88 = pneg %p82
      %p89 = scmp.eq.s32.totalorder %s14, 3
      %p90 = por %p88, %p89
      %p91 = scmp.ne.s32.totalorder %s83, %s86
      %p92 = scmp.eq.s32.totalorder %s14, 0
      %p93 = por %p91, %p92
      %p94 = scmp.ne.s32.totalorder %s83, %s86
      %p95 = scmp.eq.s32.totalorder %s19, 3
      %p96 = por %p94, %p95
      %p97 = scmp.ne.s32.totalorder %s86, %s87
      %p98 = scmp.eq.s32.totalorder %s19, 0
      %p99 = por %p97, %p98
      %p100 = scmp.ne.s32.totalorder %s86, %s87
      %p101 = scmp.eq.s32.totalorder %s20, 3
      %p102 = por %p100, %p101
      %p104 = scmp.ne.s32.totalorder %s87, %s103
      %p105 = scmp.eq.s32.totalorder %s20, 0
      %p106 = por %p104, %p105
      %s108 = sadd.s32 %s107, 1
      %p111 = scmp.eq.s32.totalorder %s14, 3
      %p112 = scmp.ne.s32.totalorder %s107, %s109
      %p113 = scmp.eq.s32.totalorder %s14, 0
      %p114 = por %p112, %p113
      %p115 = scmp.ne.s32.totalorder %s107, %s109
      %p116 = scmp.eq.s32.totalorder %s19, 3
      %p117 = por %p115, %p116
      %p118 = scmp.ne.s32.totalorder %s109, %s110
      %p119 = scmp.eq.s32.totalorder %s19, 0
      %p120 = por %p118, %p119
      %p121 = scmp.ne.s32.totalorder %s109, %s110
      %p122 = scmp.eq.s32.totalorder %s20, 3
      %p123 = por %p121, %p122
      %p125 = scmp.ne.s32.totalorder %s110, %s124
      %p126 = scmp.eq.s32.totalorder %s20, 0
      %p127 = por %p125, %p126
      %s128 = ssub.s32 %s22, %s29
      %p129 = scmp.eq.s32.totalorder %s128, 0
      %s131 = sadd.s32 %s130, 1
      %s132 = scalar_select %p129, %s130, %s131
      %p135 = pneg %p129
      %p136 = scmp.eq.s32.totalorder %s14, 3
      %p137 = por %p135, %p136
      %p138 = scmp.ne.s32.totalorder %s130, %s133
      %p139 = scmp.eq.s32.totalorder %s14, 0
      %p140 = por %p138, %p139
      %p141 = scmp.ne.s32.totalorder %s130, %s133
      %p142 = scmp.eq.s32.totalorder %s19, 3
      %p143 = por %p141, %p142
      %p144 = scmp.ne.s32.totalorder %s133, %s134
      %p145 = scmp.eq.s32.totalorder %s19, 0
      %p146 = por %p144, %p145
      %p147 = scmp.ne.s32.totalorder %s133, %s134
      %p148 = scmp.eq.s32.totalorder %s20, 3
      %p149 = por %p147, %p148
      %p151 = scmp.ne.s32.totalorder %s134, %s150
      %p152 = scmp.eq.s32.totalorder %s20, 0
      %p153 = por %p151, %p152
      %s154 = ssub.s32 %s21, %s33
      %p155 = scmp.eq.s32.totalorder %s154, 0
      %s157 = sadd.s32 %s156, 1
      %s158 = scalar_select %p155, %s156, %s157
      %p161 = pneg %p155
      %p162 = scmp.eq.s32.totalorder %s14, 3
      %p163 = por %p161, %p162
      %p164 = scmp.ne.s32.totalorder %s156, %s159
      %p165 = scmp.eq.s32.totalorder %s14, 0
      %p166 = por %p164, %p165
      %p167 = scmp.ne.s32.totalorder %s156, %s159
      %p168 = scmp.eq.s32.totalorder %s19, 3
      %p169 = por %p167, %p168
      %p170 = scmp.ne.s32.totalorder %s159, %s160
      %p171 = scmp.eq.s32.totalorder %s19, 0
      %p172 = por %p170, %p171
      %p173 = scmp.ne.s32.totalorder %s159, %s160
      %p174 = scmp.eq.s32.totalorder %s20, 3
      %p175 = por %p173, %p174
      %p177 = scmp.ne.s32.totalorder %s160, %s176
      %p178 = scmp.eq.s32.totalorder %s20, 0
      %p179 = por %p177, %p178
      %s180 = ssub.s32 %s21, %s33
      %p181 = scmp.eq.s32.totalorder %s180, 0
      %s183 = sadd.s32 %s182, 1
      %s184 = scalar_select %p181, %s182, %s183
      %p187 = pneg %p181
      %p188 = scmp.eq.s32.totalorder %s14, 3
      %p189 = por %p187, %p188
      %p190 = scmp.ne.s32.totalorder %s182, %s185
      %p191 = scmp.eq.s32.totalorder %s14, 0
      %p192 = por %p190, %p191
      %p193 = scmp.ne.s32.totalorder %s182, %s185
      %p194 = scmp.eq.s32.totalorder %s19, 3
      %p195 = por %p193, %p194
      %p196 = scmp.ne.s32.totalorder %s185, %s186
      %p197 = scmp.eq.s32.totalorder %s19, 0
      %p198 = por %p196, %p197
      %p199 = scmp.ne.s32.totalorder %s185, %s186
      %p200 = scmp.eq.s32.totalorder %s20, 3
      %p201 = por %p199, %p200
      %p203 = scmp.ne.s32.totalorder %s186, %s202
      %p204 = scmp.eq.s32.totalorder %s20, 0
      %p205 = por %p203, %p204
      %s207 = sadd.s32 %s206, 1
      %p210 = scmp.eq.s32.totalorder %s14, 3
      %p211 = scmp.ne.s32.totalorder %s206, %s208
      %p212 = scmp.eq.s32.totalorder %s14, 0
      %p213 = por %p211, %p212
      %p214 = scmp.ne.s32.totalorder %s206, %s208
      %p215 = scmp.eq.s32.totalorder %s19, 3
      %p216 = por %p214, %p215
      %p217 = scmp.ne.s32.totalorder %s208, %s209
      %p218 = scmp.eq.s32.totalorder %s19, 0
      %p219 = por %p217, %p218
      %p220 = scmp.ne.s32.totalorder %s208, %s209
      %p221 = scmp.eq.s32.totalorder %s20, 3
      %p222 = por %p220, %p221
      %p224 = scmp.ne.s32.totalorder %s209, %s223
      %p225 = scmp.eq.s32.totalorder %s20, 0
      %p226 = por %p224, %p225
      %p227 = scmp.le.s32.totalorder 1, %s14
      %p228 = scmp.lt.s32.totalorder %s14, 5
      %p229 = pnand %p227, %p228
      %p230 = pneg %p229
      // Predicated region
      $region9: #{tpu_custom_call.1} parent=5 // pred_check
        _
      $region10: #{tpu_custom_call.1} parent=5 // pred_check_branch
        %232 = sbr.rel (%p229) target = $region12
      $region11: #{tpu_custom_call.1} parent=5 // pred_region
        %s233 = ssub.s32 %s14, 1
        // Predicated region
        $region13: #{tpu_custom_call.1} parent=11 // pred_check
          %p234 = pneg %p47
        $region14: #{tpu_custom_call.1} parent=11 // pred_check_branch
          %236 = sbr.rel (%p234) target = $region16
        $region15: #{tpu_custom_call.1} parent=11 // pred_region
          _
        $region16: #{tpu_custom_call.1} parent=11 // pred_fallthru
          _
        // Predicated region
        $region17: #{tpu_custom_call.1} parent=11 // pred_check
          %p237 = pneg %p73
        $region18: #{tpu_custom_call.1} parent=11 // pred_check_branch
          %239 = sbr.rel (%p237) target = $region20
        $region19: #{tpu_custom_call.1} parent=11 // pred_region
          %s240 = smul.u32 16, %s24
          %p241 = scmp.lt.s32.totalorder %s240, 15
          %s242 = scalar_select %p241, %s240, 15
          %s243 = smul.addr %s242, 4
          %s244 = scalar_lea.vmem %s1, %s243
          %s245 = smul.u32 16, %s24
        $region20: #{tpu_custom_call.1} parent=11 // pred_fallthru
          _
        // Predicated region
        $region21: #{tpu_custom_call.1} parent=11 // pred_check
          %p246 = pneg %p99
        $region22: #{tpu_custom_call.1} parent=11 // pred_check_branch
          %248 = sbr.rel (%p246) target = $region24
        $region23: #{tpu_custom_call.1} parent=11 // pred_region
          %s249 = smul.u32 16, %s24
          %p250 = scmp.lt.s32.totalorder %s249, 15
          %s251 = scalar_select %p250, %s249, 15
          %s252 = smul.addr %s251, 8
          %s253 = scalar_lea.vmem %s2, %s252
          %s254 = smul.u32 16, %s24
        $region24: #{tpu_custom_call.1} parent=11 // pred_fallthru
          _
        // Predicated region
        $region25: #{tpu_custom_call.1} parent=11 // pred_check
          %p255 = pneg %p120
        $region26: #{tpu_custom_call.1} parent=11 // pred_check_branch
          %257 = sbr.rel (%p255) target = $region28
        $region27: #{tpu_custom_call.1} parent=11 // pred_region
          _
        $region28: #{tpu_custom_call.1} parent=11 // pred_fallthru
          _
        // Predicated region
        $region29: #{tpu_custom_call.1} parent=11 // pred_check
          %p258 = pneg %p146
        $region30: #{tpu_custom_call.1} parent=11 // pred_check_branch
          %260 = sbr.rel (%p258) target = $region32
        $region31: #{tpu_custom_call.1} parent=11 // pred_region
          %p261 = scmp.lt.s32.totalorder %s24, 0
          %s262 = scalar_select %p261, %s24, 0
          %s263 = smul.addr %s262, 4
          %s264 = scalar_lea.vmem %s4, %s263
        $region32: #{tpu_custom_call.1} parent=11 // pred_fallthru
          _
      $region12: #{tpu_custom_call.1} parent=5 // pred_fallthru
        _
      %p265 = scmp.lt.s32.totalorder %s14, 4
      // Predicated region
      $region33: #{tpu_custom_call.1} parent=5 // pred_check
        %p266 = pneg %p265
      $region34: #{tpu_custom_call.1} parent=5 // pred_check_branch
        %268 = sbr.rel (%p266) target = $region36
      $region35: #{tpu_custom_call.1} parent=5 // pred_region
        // Predicated region
        $region37: #{tpu_custom_call.1} parent=35 // pred_check
          %p269 = pneg %p166
        $region38: #{tpu_custom_call.1} parent=35 // pred_check_branch
          %271 = sbr.rel (%p269) target = $region40
        $region39: #{tpu_custom_call.1} parent=35 // pred_region
          %p272 = scmp.lt.s32.totalorder %s21, 3
          %s273 = scalar_select %p272, %s21, 3
          %s274 = smul.addr %s273, 8
          %s275 = smul.addr %s274, 4
          %s276 = scalar_lea.vmem %s5, %s275
        $region40: #{tpu_custom_call.1} parent=35 // pred_fallthru
          _
        // Predicated region
        $region41: #{tpu_custom_call.1} parent=35 // pred_check
          %p277 = pneg %p192
        $region42: #{tpu_custom_call.1} parent=35 // pred_check_branch
          %279 = sbr.rel (%p277) target = $region44
        $region43: #{tpu_custom_call.1} parent=35 // pred_region
          %p280 = scmp.lt.s32.totalorder %s21, 3
          %s281 = scalar_select %p280, %s21, 3
          %s282 = scalar_lea.vmem %s6, %s281
        $region44: #{tpu_custom_call.1} parent=35 // pred_fallthru
          _
      $region36: #{tpu_custom_call.1} parent=5 // pred_fallthru
        _
      %p283 = scmp.le.s32.totalorder 1, %s14
      %p284 = scmp.lt.s32.totalorder %s14, 5
      %p285 = pnand %p283, %p284
      %p286 = pneg %p285
      // Predicated region
      $region45: #{tpu_custom_call.1} parent=5 // pred_check
        _
      $region46: #{tpu_custom_call.1} parent=5 // pred_check_branch
        %288 = sbr.rel (%p285) target = $region48
      $region47: #{tpu_custom_call.1} parent=5 // pred_region
        %s289 = ssub.s32 %s14, 1
        %p290 = pneg %p47
        %p291 = pneg %p44
        %s292 = smul.u32 16, %s24
        %p293 = scmp.lt.s32.totalorder %s292, 15
        %s294 = scalar_select %p293, %s292, 15
        %s295 = smul.addr %s294, 4
        %s296 = scalar_lea.vmem %s1, %s295
        %p297 = pneg %p73
        %p298 = pneg %p70
        %s299 = smul.u32 16, %s24
        %p300 = scmp.lt.s32.totalorder %s299, 15
        %s301 = scalar_select %p300, %s299, 15
        %s302 = smul.addr %s301, 8
        %s303 = scalar_lea.vmem %s2, %s302
        %p304 = pneg %p99
        %p305 = pneg %p96
        %p306 = pneg %p120
        %p307 = pneg %p117
        %p308 = scmp.lt.s32.totalorder %s24, 0
        %s309 = scalar_select %p308, %s24, 0
        %s310 = smul.addr %s309, 4
        %s311 = scalar_lea.vmem %s4, %s310
        %p312 = pneg %p146
        %p313 = pneg %p143
        %p314 = scmp.lt.s32.totalorder %s23, 3
        %s315 = scalar_select %p314, %s23, 3
        %s316 = smul.addr %s315, 8
        %s317 = smul.addr %s316, 4
        %s318 = scalar_lea.vmem %s5, %s317
        %p319 = pneg %p172
        %p320 = pneg %p169
        %p321 = scmp.lt.s32.totalorder %s23, 3
        %s322 = scalar_select %p321, %s23, 3
        %s323 = scalar_lea.vmem %s6, %s322
        %p324 = pneg %p198
        %p325 = pneg %p195
        %p326 = pneg %p219
        %p327 = pneg %p216
        %s328 = smul.u32 16, %s24
        %p329 = scmp.lt.s32.totalorder %s328, 15
        %s330 = scalar_select %p329, %s328, 15
        %s331 = smul.addr %s330, 4
        %s332 = scalar_lea.vmem %s1, %s331
        %s333 = smul.u32 16, %s24
        %s334 = smul.u32 16, %s24
        %p335 = scmp.lt.s32.totalorder %s334, 15
        %s336 = scalar_select %p335, %s334, 15
        %s337 = smul.addr %s336, 8
        %s338 = scalar_lea.vmem %s2, %s337
        %s339 = smul.u32 16, %s24
        %p340 = scmp.lt.s32.totalorder %s24, 0
        %s341 = scalar_select %p340, %s24, 0
        %s342 = smul.addr %s341, 4
        %s343 = scalar_lea.vmem %s4, %s342
        %p344 = scmp.lt.s32.totalorder %s23, 3
        %s345 = scalar_select %p344, %s23, 3
        %s346 = smul.addr %s345, 8
        %s347 = smul.addr %s346, 4
        %s348 = scalar_lea.vmem %s5, %s347
        %p349 = scmp.lt.s32.totalorder %s23, 3
        %s350 = scalar_select %p349, %s23, 3
        %s351 = scalar_lea.vmem %s6, %s350
        %p353 = scmp.lt.s32.totalorder %s23, 0
        %s354 = ssub.s32 0, %s23
        %s355 = scalar_select %p353, %s354, %s23
        %s356 = sand.u32 %s355, 1
        %s357 = ssub.s32 0, %s356
        %s358 = scalar_select %p353, %s357, %s356
        %p359 = scmp.ne.s32.totalorder %s358, 0
        %p360 = scmp.lt.s32.totalorder %s358, 0
        %p361 = pnand %p360, %p359
        %p362 = pneg %p361
        %s363 = sadd.s32 %s358, 2
        %s364 = scalar_select %p362, %s363, %s358
        %p365 = scmp.eq.s32.totalorder %s23, 3
        %p366 = scmp.eq.s32.totalorder %s23, 0
        %p367 = scmp.eq.s32.totalorder %s24, 0
        %p368 = pnand %p366, %p367
        %p369 = pneg %p368
        // Predicated region
        $region49: #{tpu_custom_call.1} parent=47 // pred_check
          _
        $region50: #{tpu_custom_call.1} parent=47 // pred_check_branch
          %371 = sbr.rel (%p368) target = $region52
        $region51: #{tpu_custom_call.1} parent=47 // pred_region
          %v372 = vld [vmem:[%s0] sm:$0xf]
          %v373 = vld [vmem:[%s0 + $0x4] sm:$0xf]
          %v374 = vld [vmem:[%s0 + $0x8] sm:$0xf]
          %v375 = vld [vmem:[%s0 + $0xc] sm:$0xf]
          %v376 = vld [vmem:[%s0 + $0x10] sm:$0xf]
          %v377 = vld [vmem:[%s0 + $0x14] sm:$0xf]
          %v378 = vld [vmem:[%s0 + $0x18] sm:$0xf]
          %v379 = vld [vmem:[%s0 + $0x1c] sm:$0xf]
          %v380 = vld [vmem:[%s0 + $0x20] sm:$0xf]
          %v381 = vld [vmem:[%s0 + $0x24] sm:$0xf]
          %v382 = vld [vmem:[%s0 + $0x28] sm:$0xf]
          %v383 = vld [vmem:[%s0 + $0x2c] sm:$0xf]
          %v384 = vld [vmem:[%s0 + $0x30] sm:$0xf]
          %v385 = vld [vmem:[%s0 + $0x34] sm:$0xf]
          %v386 = vld [vmem:[%s0 + $0x38] sm:$0xf]
          %v387 = vld [vmem:[%s0 + $0x3c] sm:$0xf]
          %v404 = vunpack.c.l.b16 %v372
          %v405 = vunpack.c.l.b16 %v373
          %v406 = vunpack.c.l.b16 %v374
          %v407 = vunpack.c.l.b16 %v375
          %v408 = vunpack.c.l.b16 %v376
          %v409 = vunpack.c.l.b16 %v377
          %v410 = vunpack.c.l.b16 %v378
          %v411 = vunpack.c.l.b16 %v379
          %v412 = vunpack.c.l.b16 %v380
          %v413 = vunpack.c.l.b16 %v381
          %v414 = vunpack.c.l.b16 %v382
          %v415 = vunpack.c.l.b16 %v383
          %v416 = vunpack.c.l.b16 %v384
          %v417 = vunpack.c.l.b16 %v385
          %v418 = vunpack.c.l.b16 %v386
          %v419 = vunpack.c.l.b16 %v387
          %v420 = vpack.c.b16 %v405, %v404
          %v421 = vpack.c.b16 %v407, %v406
          %v422 = vpack.c.b16 %v409, %v408
          %v423 = vpack.c.b16 %v411, %v410
          %v424 = vpack.c.b16 %v413, %v412
          %v425 = vpack.c.b16 %v415, %v414
          %v426 = vpack.c.b16 %v417, %v416
          %v427 = vpack.c.b16 %v419, %v418
          %vm436 = vcmask 523264
          %437 = vst.msk [vmem:[#allocation2] sm:$0xff] %vm436, %v420
          %438 = vst.msk [vmem:[#allocation2 + $0x8] sm:$0xff] %vm436, %v421
          %439 = vst.msk [vmem:[#allocation2 + $0x10] sm:$0xff] %vm436, %v422
          %440 = vst.msk [vmem:[#allocation2 + $0x18] sm:$0xff] %vm436, %v423
          %441 = vst.msk [vmem:[#allocation2 + $0x20] sm:$0xff] %vm436, %v424
          %442 = vst.msk [vmem:[#allocation2 + $0x28] sm:$0xff] %vm436, %v425
          %443 = vst.msk [vmem:[#allocation2 + $0x30] sm:$0xff] %vm436, %v426
          %444 = vst.msk [vmem:[#allocation2 + $0x38] sm:$0xff] %vm436, %v427
        $region52: #{tpu_custom_call.1} parent=47 // pred_fallthru
          _
        // Predicated region
        $region53: #{tpu_custom_call.1} parent=47 // pred_check
          %p445 = pneg %p367
        $region54: #{tpu_custom_call.1} parent=47 // pred_check_branch
          %447 = sbr.rel (%p445) target = $region56
        $region55: #{tpu_custom_call.1} parent=47 // pred_region
          %p448 = scmp.eq.s32.totalorder %s364, 0
          %v449 = vld [vmem:[#allocation2] sm:$0xff]
          %v450 = vld [vmem:[#allocation2 + $0x8] sm:$0xff]
          %v451 = vld [vmem:[#allocation2 + $0x10] sm:$0xff]
          %v452 = vld [vmem:[#allocation2 + $0x18] sm:$0xff]
          %v453 = vld [vmem:[#allocation2 + $0x20] sm:$0xff]
          %v454 = vld [vmem:[#allocation2 + $0x28] sm:$0xff]
          %v455 = vld [vmem:[#allocation2 + $0x30] sm:$0xff]
          %v456 = vld [vmem:[#allocation2 + $0x38] sm:$0xff]
          %v457 = vld [vmem:[#allocation3] sm:$0xff]
          %v458 = vld [vmem:[#allocation3 + $0x8] sm:$0xff]
          %v459 = vld [vmem:[#allocation3 + $0x10] sm:$0xff]
          %v460 = vld [vmem:[#allocation3 + $0x18] sm:$0xff]
          %v461 = vld [vmem:[#allocation3 + $0x20] sm:$0xff]
          %v462 = vld [vmem:[#allocation3 + $0x28] sm:$0xff]
          %v463 = vld [vmem:[#allocation3 + $0x30] sm:$0xff]
          %v464 = vld [vmem:[#allocation3 + $0x38] sm:$0xff]
          %s465 = scalar_select %p448, 1, 0
          %v466 = vstv %s465
          %vm467 = vcmp.eq.s32.totalorder %v466, 1
          %v468 = vsel %vm467, %v449, %v457
          %v469 = vsel %vm467, %v450, %v458
          %v470 = vsel %vm467, %v451, %v459
          %v471 = vsel %vm467, %v452, %v460
          %v472 = vsel %vm467, %v453, %v461
          %v473 = vsel %vm467, %v454, %v462
          %v474 = vsel %vm467, %v455, %v463
          %v475 = vsel %vm467, %v456, %v464
          %v476 = vld [vmem:[%s348] sm:$0xf]
          %v477 = vld [vmem:[%s348 + $0x4] sm:$0xf]
          %v478 = vld [vmem:[%s348 + $0x8] sm:$0xf]
          %v479 = vld [vmem:[%s348 + $0xc] sm:$0xf]
          %v480 = vld [vmem:[%s348 + $0x10] sm:$0xf]
          %v481 = vld [vmem:[%s348 + $0x14] sm:$0xf]
          %v482 = vld [vmem:[%s348 + $0x18] sm:$0xf]
          %v483 = vld [vmem:[%s348 + $0x1c] sm:$0xf]
          %v492 = vunpack.c.l.b16 %v476
          %v493 = vunpack.c.l.b16 %v477
          %v494 = vunpack.c.l.b16 %v478
          %v495 = vunpack.c.l.b16 %v479
          %v496 = vunpack.c.l.b16 %v480
          %v497 = vunpack.c.l.b16 %v481
          %v498 = vunpack.c.l.b16 %v482
          %v499 = vunpack.c.l.b16 %v483
          %v500 = vpack.c.b16 %v493, %v492
          %v501 = vpack.c.b16 %v495, %v494
          %v502 = vpack.c.b16 %v497, %v496
          %v503 = vpack.c.b16 %v499, %v498
          %vm508 = vcmask 523264
          %v510 = vsel %vm508, %v468, 0
          %v513 = vsel %vm508, %v469, 0
          %v516 = vsel %vm508, %v470, 0
          %v519 = vsel %vm508, %v471, 0
          %v522 = vsel %vm508, %v472, 0
          %v525 = vsel %vm508, %v473, 0
          %v528 = vsel %vm508, %v474, 0
          %v531 = vsel %vm508, %v475, 0
          %533 = vmatprep.subr.bf16.mxu0 0
          %534 = vmatpush1.bf16.msra.mxu0 %v500
          %535 = vmatprep.subr.bf16.mxu0 0
          %536 = vmatpush1.bf16.msra.mxu0 %v501
          %537 = vmatprep.subr.bf16.mxu0 0
          %538 = vmatpush1.bf16.msra.mxu0 %v502
          %539 = vmatprep.subr.bf16.mxu0 0
          %540 = vmatpush1.bf16.msra.mxu0 %v503
          %541 = vmatprep.subr.bf16.mxu0 0
          %542 = vmatpush1.bf16.msra.mxu0 0
          %543 = vmatprep.subr.bf16.mxu0 0
          %544 = vmatpush1.bf16.msra.mxu0 0
          %545 = vmatprep.subr.bf16.mxu0 0
          %546 = vmatpush1.bf16.msra.mxu0 0
          %547 = vmatprep.subr.bf16.mxu0 0
          %548 = vmatpush1.bf16.msra.mxu0 0
          %549 = vmatprep.subr.bf16.mxu0 0
          %550 = vmatpush1.bf16.msra.mxu0 0
          %551 = vmatprep.subr.bf16.mxu0 0
          %552 = vmatpush1.bf16.msra.mxu0 0
          %553 = vmatprep.subr.bf16.mxu0 0
          %554 = vmatpush1.bf16.msra.mxu0 0
          %555 = vmatprep.subr.bf16.mxu0 0
          %556 = vmatpush1.bf16.msra.mxu0 0
          %557 = vmatprep.subr.bf16.mxu0 0
          %558 = vmatpush1.bf16.msra.mxu0 0
          %559 = vmatprep.subr.bf16.mxu0 0
          %560 = vmatpush1.bf16.msra.mxu0 0
          %561 = vmatprep.subr.bf16.mxu0 0
          %562 = vmatpush1.bf16.msra.mxu0 0
          %563 = vmatprep.subr.bf16.mxu0 0
          %564 = vmatpush1.bf16.msra.mxu0 0
          %565 = vmatprep.mubr.bf16.mxu0 0
          %566 = vmatmul.mubr.bf16.gmra.mrb[0].mxu0 %v510
          %v567 = vpop.f32.mrb[0].mxu0
          %v568 = vadd.f32 0.0, %v567
          %v569 = vpop.f32.mrb[0].mxu0
          %v570 = vpop.f32.mrb[0].mxu0
          %v571 = vadd.f32 0.0, %v570
          %v572 = vpop.f32.mrb[0].mxu0
          %573 = vmatprep.mubr.bf16.mxu0 0
          %574 = vmatmul.mubr.bf16.gmra.mrb[0].mxu0 %v513
          %v575 = vpop.f32.mrb[0].mxu0
          %v576 = vadd.f32 0.0, %v575
          %v577 = vpop.f32.mrb[0].mxu0
          %v578 = vpop.f32.mrb[0].mxu0
          %v579 = vadd.f32 0.0, %v578
          %v580 = vpop.f32.mrb[0].mxu0
          %581 = vmatprep.mubr.bf16.mxu0 0
          %582 = vmatmul.mubr.bf16.gmra.mrb[0].mxu0 %v516
          %v583 = vpop.f32.mrb[0].mxu0
          %v584 = vadd.f32 0.0, %v583
          %v585 = vpop.f32.mrb[0].mxu0
          %v586 = vpop.f32.mrb[0].mxu0
          %v587 = vadd.f32 0.0, %v586
          %v588 = vpop.f32.mrb[0].mxu0
          %589 = vmatprep.mubr.bf16.mxu0 0
          %590 = vmatmul.mubr.bf16.gmra.mrb[0].mxu0 %v519
          %v591 = vpop.f32.mrb[0].mxu0
          %v592 = vadd.f32 0.0, %v591
          %v593 = vpop.f32.mrb[0].mxu0
          %v594 = vpop.f32.mrb[0].mxu0
          %v595 = vadd.f32 0.0, %v594
          %v596 = vpop.f32.mrb[0].mxu0
          %597 = vmatprep.mubr.bf16.mxu0 0
          %598 = vmatmul.mubr.bf16.gmra.mrb[0].mxu0 %v522
          %v599 = vpop.f32.mrb[0].mxu0
          %v600 = vadd.f32 0.0, %v599
          %v601 = vpop.f32.mrb[0].mxu0
          %v602 = vpop.f32.mrb[0].mxu0
          %v603 = vadd.f32 0.0, %v602
          %v604 = vpop.f32.mrb[0].mxu0
          %605 = vmatprep.mubr.bf16.mxu0 0
          %606 = vmatmul.mubr.bf16.gmra.mrb[0].mxu0 %v525
          %v607 = vpop.f32.mrb[0].mxu0
          %v608 = vadd.f32 0.0, %v607
          %v609 = vpop.f32.mrb[0].mxu0
          %v610 = vpop.f32.mrb[0].mxu0
          %v611 = vadd.f32 0.0, %v610
          %v612 = vpop.f32.mrb[0].mxu0
          %613 = vmatprep.mubr.bf16.mxu0 0
          %614 = vmatmul.mubr.bf16.gmra.mrb[0].mxu0 %v528
          %v615 = vpop.f32.mrb[0].mxu0
          %v616 = vadd.f32 0.0, %v615
          %v617 = vpop.f32.mrb[0].mxu0
          %v618 = vpop.f32.mrb[0].mxu0
          %v619 = vadd.f32 0.0, %v618
          %v620 = vpop.f32.mrb[0].mxu0
          %621 = vmatprep.mubr.bf16.mxu0 0
          %622 = vmatmul.mubr.bf16.gmra.mrb[0].mxu0 %v531
          %v623 = vpop.f32.mrb[0].mxu0
          %v624 = vadd.f32 0.0, %v623
          %v625 = vpop.f32.mrb[0].mxu0
          %v626 = vpop.f32.mrb[0].mxu0
          %v627 = vadd.f32 0.0, %v626
          %v628 = vpop.f32.mrb[0].mxu0
          %629 = vdwg.mxu0
          %v630 = vpack.c.bf16 %v571, %v568
          %v631 = vpack.c.bf16 %v579, %v576
          %v632 = vpack.c.bf16 %v587, %v584
          %v633 = vpack.c.bf16 %v595, %v592
          %v634 = vpack.c.bf16 %v603, %v600
          %v635 = vpack.c.bf16 %v611, %v608
          %v636 = vpack.c.bf16 %v619, %v616
          %v637 = vpack.c.bf16 %v627, %v624
          %638 = vst.msk [vmem:[#allocation4] sm:$0xff] %vm508, %v630
          %639 = vst.msk [vmem:[#allocation4 + $0x8] sm:$0xff] %vm508, %v631
          %640 = vst.msk [vmem:[#allocation4 + $0x10] sm:$0xff] %vm508, %v632
          %641 = vst.msk [vmem:[#allocation4 + $0x18] sm:$0xff] %vm508, %v633
          %642 = vst.msk [vmem:[#allocation4 + $0x20] sm:$0xff] %vm508, %v634
          %643 = vst.msk [vmem:[#allocation4 + $0x28] sm:$0xff] %vm508, %v635
          %644 = vst.msk [vmem:[#allocation4 + $0x30] sm:$0xff] %vm508, %v636
          %645 = vst.msk [vmem:[#allocation4 + $0x38] sm:$0xff] %vm508, %v637
        $region56: #{tpu_custom_call.1} parent=47 // pred_fallthru
          _
        %v646 = vld [vmem:[%s338] sm:$0xff]
        %v647 = vld [vmem:[%s338 + $0x8] sm:$0xff]
        %v648 = vld [vmem:[%s338 + $0x10] sm:$0xff]
        %v649 = vld [vmem:[%s338 + $0x18] sm:$0xff]
        %v650 = vld [vmem:[%s338 + $0x20] sm:$0xff]
        %v651 = vld [vmem:[%s338 + $0x28] sm:$0xff]
        %v652 = vld [vmem:[%s338 + $0x30] sm:$0xff]
        %v653 = vld [vmem:[%s338 + $0x38] sm:$0xff]
        %v654 = vld [vmem:[%s338 + $0x40] sm:$0xff]
        %v655 = vld [vmem:[%s338 + $0x48] sm:$0xff]
        %v656 = vld [vmem:[%s338 + $0x50] sm:$0xff]
        %v657 = vld [vmem:[%s338 + $0x58] sm:$0xff]
        %v658 = vld [vmem:[%s338 + $0x60] sm:$0xff]
        %v659 = vld [vmem:[%s338 + $0x68] sm:$0xff]
        %v660 = vld [vmem:[%s338 + $0x70] sm:$0xff]
        %v661 = vld [vmem:[%s338 + $0x78] sm:$0xff]
        %v662 = vld [vmem:[%s332] sm:$0xf]
        %v663 = vld [vmem:[%s332 + $0x4] sm:$0xf]
        %v664 = vld [vmem:[%s332 + $0x8] sm:$0xf]
        %v665 = vld [vmem:[%s332 + $0xc] sm:$0xf]
        %v666 = vld [vmem:[%s332 + $0x10] sm:$0xf]
        %v667 = vld [vmem:[%s332 + $0x14] sm:$0xf]
        %v668 = vld [vmem:[%s332 + $0x18] sm:$0xf]
        %v669 = vld [vmem:[%s332 + $0x1c] sm:$0xf]
        %v670 = vld [vmem:[%s332 + $0x20] sm:$0xf]
        %v671 = vld [vmem:[%s332 + $0x24] sm:$0xf]
        %v672 = vld [vmem:[%s332 + $0x28] sm:$0xf]
        %v673 = vld [vmem:[%s332 + $0x2c] sm:$0xf]
        %v674 = vld [vmem:[%s332 + $0x30] sm:$0xf]
        %v675 = vld [vmem:[%s332 + $0x34] sm:$0xf]
        %v676 = vld [vmem:[%s332 + $0x38] sm:$0xf]
        %v677 = vld [vmem:[%s332 + $0x3c] sm:$0xf]
        %v678 = vunpack.c.l.bf16 %v662
        %v679 = vunpack.c.l.bf16 %v663
        %v680 = vunpack.c.l.bf16 %v664
        %v681 = vunpack.c.l.bf16 %v665
        %v682 = vunpack.c.l.bf16 %v666
        %v683 = vunpack.c.l.bf16 %v667
        %v684 = vunpack.c.l.bf16 %v668
        %v685 = vunpack.c.l.bf16 %v669
        %v686 = vunpack.c.l.bf16 %v670
        %v687 = vunpack.c.l.bf16 %v671
        %v688 = vunpack.c.l.bf16 %v672
        %v689 = vunpack.c.l.bf16 %v673
        %v690 = vunpack.c.l.bf16 %v674
        %v691 = vunpack.c.l.bf16 %v675
        %v692 = vunpack.c.l.bf16 %v676
        %v693 = vunpack.c.l.bf16 %v677
        %695 = vset.pattern.permute.xlu0 0
        %696 = vperm.xlu0 %695, %v646
        %v697 = vpop.permute.xlu0 %696
        %700 = vset.pattern.permute.xlu0 0
        %701 = vperm.xlu0 %700, %v647
        %v702 = vpop.permute.xlu0 %701
        %705 = vset.pattern.permute.xlu0 0
        %706 = vperm.xlu0 %705, %v648
        %v707 = vpop.permute.xlu0 %706
        %710 = vset.pattern.permute.xlu0 0
        %711 = vperm.xlu0 %710, %v649
        %v712 = vpop.permute.xlu0 %711
        %715 = vset.pattern.permute.xlu0 0
        %716 = vperm.xlu0 %715, %v650
        %v717 = vpop.permute.xlu0 %716
        %720 = vset.pattern.permute.xlu0 0
        %721 = vperm.xlu0 %720, %v651
        %v722 = vpop.permute.xlu0 %721
        %725 = vset.pattern.permute.xlu0 0
        %726 = vperm.xlu0 %725, %v652
        %v727 = vpop.permute.xlu0 %726
        %730 = vset.pattern.permute.xlu0 0
        %731 = vperm.xlu0 %730, %v653
        %v732 = vpop.permute.xlu0 %731
        %735 = vset.pattern.permute.xlu0 0
        %736 = vperm.xlu0 %735, %v654
        %v737 = vpop.permute.xlu0 %736
        %740 = vset.pattern.permute.xlu0 0
        %741 = vperm.xlu0 %740, %v655
        %v742 = vpop.permute.xlu0 %741
        %745 = vset.pattern.permute.xlu0 0
        %746 = vperm.xlu0 %745, %v656
        %v747 = vpop.permute.xlu0 %746
        %750 = vset.pattern.permute.xlu0 0
        %751 = vperm.xlu0 %750, %v657
        %v752 = vpop.permute.xlu0 %751
        %755 = vset.pattern.permute.xlu0 0
        %756 = vperm.xlu0 %755, %v658
        %v757 = vpop.permute.xlu0 %756
        %760 = vset.pattern.permute.xlu0 0
        %761 = vperm.xlu0 %760, %v659
        %v762 = vpop.permute.xlu0 %761
        %765 = vset.pattern.permute.xlu0 0
        %766 = vperm.xlu0 %765, %v660
        %v767 = vpop.permute.xlu0 %766
        %770 = vset.pattern.permute.xlu0 0
        %771 = vperm.xlu0 %770, %v661
        %v772 = vpop.permute.xlu0 %771
        %v774 = vmul.f32 %v697, %v678
        %v775 = vmul.f32 %v702, %v679
        %v776 = vmul.f32 %v707, %v680
        %v777 = vmul.f32 %v712, %v681
        %v778 = vmul.f32 %v717, %v682
        %v779 = vmul.f32 %v722, %v683
        %v780 = vmul.f32 %v727, %v684
        %v781 = vmul.f32 %v732, %v685
        %v782 = vmul.f32 %v737, %v686
        %v783 = vmul.f32 %v742, %v687
        %v784 = vmul.f32 %v747, %v688
        %v785 = vmul.f32 %v752, %v689
        %v786 = vmul.f32 %v757, %v690
        %v787 = vmul.f32 %v762, %v691
        %v788 = vmul.f32 %v767, %v692
        %v789 = vmul.f32 %v772, %v693
        %v790 = vld [vmem:[%s3] sm:$0x1]
        %v792 = vlaneseq
        %v793 = vshrl.u32 %v792, 7
        %v794 = vsub.s32 0, %v793
        %v795 = vrot.slane %v790, %v794
        %v797 = vmul.f32 %v774, %v795
        %v798 = vmul.f32 %v775, %v795
        %v799 = vmul.f32 %v776, %v795
        %v800 = vmul.f32 %v777, %v795
        %v801 = vmul.f32 %v778, %v795
        %v802 = vmul.f32 %v779, %v795
        %v803 = vmul.f32 %v780, %v795
        %v804 = vmul.f32 %v781, %v795
        %v805 = vmul.f32 %v782, %v795
        %v806 = vmul.f32 %v783, %v795
        %v807 = vmul.f32 %v784, %v795
        %v808 = vmul.f32 %v785, %v795
        %v809 = vmul.f32 %v786, %v795
        %v810 = vmul.f32 %v787, %v795
        %v811 = vmul.f32 %v788, %v795
        %v812 = vmul.f32 %v789, %v795
        %v813 = vpack.c.bf16 %v798, %v797
        %v814 = vpack.c.bf16 %v800, %v799
        %v815 = vpack.c.bf16 %v802, %v801
        %v816 = vpack.c.bf16 %v804, %v803
        %v817 = vpack.c.bf16 %v806, %v805
        %v818 = vpack.c.bf16 %v808, %v807
        %v819 = vpack.c.bf16 %v810, %v809
        %v820 = vpack.c.bf16 %v812, %v811
        %v821 = vld [vmem:[#allocation4] sm:$0xff]
        %v822 = vld [vmem:[#allocation4 + $0x8] sm:$0xff]
        %v823 = vld [vmem:[#allocation4 + $0x10] sm:$0xff]
        %v824 = vld [vmem:[#allocation4 + $0x18] sm:$0xff]
        %v825 = vld [vmem:[#allocation4 + $0x20] sm:$0xff]
        %v826 = vld [vmem:[#allocation4 + $0x28] sm:$0xff]
        %v827 = vld [vmem:[#allocation4 + $0x30] sm:$0xff]
        %v828 = vld [vmem:[#allocation4 + $0x38] sm:$0xff]
        %vm829 = vcmp.gt.f32.partialorder %v646, 0.0
        %vm830 = vcmp.gt.f32.partialorder %v647, 0.0
        %vm831 = vcmp.gt.f32.partialorder %v648, 0.0
        %vm832 = vcmp.gt.f32.partialorder %v649, 0.0
        %vm833 = vcmp.gt.f32.partialorder %v650, 0.0
        %vm834 = vcmp.gt.f32.partialorder %v651, 0.0
        %vm835 = vcmp.gt.f32.partialorder %v652, 0.0
        %vm836 = vcmp.gt.f32.partialorder %v653, 0.0
        %vm837 = vcmp.gt.f32.partialorder %v654, 0.0
        %vm838 = vcmp.gt.f32.partialorder %v655, 0.0
        %vm839 = vcmp.gt.f32.partialorder %v656, 0.0
        %vm840 = vcmp.gt.f32.partialorder %v657, 0.0
        %vm841 = vcmp.gt.f32.partialorder %v658, 0.0
        %vm842 = vcmp.gt.f32.partialorder %v659, 0.0
        %vm843 = vcmp.gt.f32.partialorder %v660, 0.0
        %vm844 = vcmp.gt.f32.partialorder %v661, 0.0
        %v845 = vsel %vm829, 1, 0
        %v846 = vsel %vm830, 1, 0
        %v847 = vsel %vm831, 1, 0
        %v848 = vsel %vm832, 1, 0
        %v849 = vsel %vm833, 1, 0
        %v850 = vsel %vm834, 1, 0
        %v851 = vsel %vm835, 1, 0
        %v852 = vsel %vm836, 1, 0
        %v853 = vsel %vm837, 1, 0
        %v854 = vsel %vm838, 1, 0
        %v855 = vsel %vm839, 1, 0
        %v856 = vsel %vm840, 1, 0
        %v857 = vsel %vm841, 1, 0
        %v858 = vsel %vm842, 1, 0
        %v859 = vsel %vm843, 1, 0
        %v860 = vsel %vm844, 1, 0
        %v861 = vcvt.s32.f32 %v845
        %v862 = vcvt.s32.f32 %v846
        %v863 = vcvt.s32.f32 %v847
        %v864 = vcvt.s32.f32 %v848
        %v865 = vcvt.s32.f32 %v849
        %v866 = vcvt.s32.f32 %v850
        %v867 = vcvt.s32.f32 %v851
        %v868 = vcvt.s32.f32 %v852
        %v869 = vcvt.s32.f32 %v853
        %v870 = vcvt.s32.f32 %v854
        %v871 = vcvt.s32.f32 %v855
        %v872 = vcvt.s32.f32 %v856
        %v873 = vcvt.s32.f32 %v857
        %v874 = vcvt.s32.f32 %v858
        %v875 = vcvt.s32.f32 %v859
        %v876 = vcvt.s32.f32 %v860
        %v877 = vld [vmem:[%s351] sm:$0x1]
        %v879 = vlaneseq
        %v880 = vshrl.u32 %v879, 7
        %v881 = vsub.s32 0, %v880
        %v882 = vrot.slane %v877, %v881
        %884 = vmatprep.subr.bf16.mxu0 0
        %885 = vmatpush1.bf16.msra.mxu0 %v821
        %886 = vmatprep.subr.bf16.mxu0 0
        %887 = vmatpush1.bf16.msra.mxu0 %v822
        %888 = vmatprep.subr.bf16.mxu0 0
        %889 = vmatpush1.bf16.msra.mxu0 %v823
        %890 = vmatprep.subr.bf16.mxu0 0
        %891 = vmatpush1.bf16.msra.mxu0 %v824
        %892 = vmatprep.subr.bf16.mxu0 0
        %893 = vmatpush1.bf16.msra.mxu0 %v825
        %894 = vmatprep.subr.bf16.mxu0 0
        %895 = vmatpush1.bf16.msra.mxu0 %v826
        %896 = vmatprep.subr.bf16.mxu0 0
        %897 = vmatpush1.bf16.msra.mxu0 %v827
        %898 = vmatprep.subr.bf16.mxu0 0
        %899 = vmatpush1.bf16.msra.mxu0 %v828
        %900 = vmatprep.subr.bf16.mxu0 0
        %901 = vmatpush1.bf16.msra.mxu0 0
        %902 = vmatprep.subr.bf16.mxu0 0
        %903 = vmatpush1.bf16.msra.mxu0 0
        %904 = vmatprep.subr.bf16.mxu0 0
        %905 = vmatpush1.bf16.msra.mxu0 0
        %906 = vmatprep.subr.bf16.mxu0 0
        %907 = vmatpush1.bf16.msra.mxu0 0
        %908 = vmatprep.subr.bf16.mxu0 0
        %909 = vmatpush1.bf16.msra.mxu0 0
        %910 = vmatprep.subr.bf16.mxu0 0
        %911 = vmatpush1.bf16.msra.mxu0 0
        %912 = vmatprep.subr.bf16.mxu0 0
        %913 = vmatpush1.bf16.msra.mxu0 0
        %914 = vmatprep.subr.bf16.mxu0 0
        %915 = vmatpush1.bf16.msra.mxu0 0
        %916 = vmatprep.mubr.bf16.mxu0 0
        %917 = vmatmul.mubr.bf16.gmra.mrb[0].mxu0 %v813
        %v918 = vpop.f32.mrb[0].mxu0
        %v919 = vadd.f32 %v882, %v918
        %v920 = vpop.f32.mrb[0].mxu0
        %v921 = vpop.f32.mrb[0].mxu0
        %v922 = vadd.f32 %v882, %v921
        %v923 = vpop.f32.mrb[0].mxu0
        %924 = vmatprep.mubr.bf16.mxu0 0
        %925 = vmatmul.mubr.bf16.gmra.mrb[0].mxu0 %v814
        %v926 = vpop.f32.mrb[0].mxu0
        %v927 = vadd.f32 %v882, %v926
        %v928 = vpop.f32.mrb[0].mxu0
        %v929 = vpop.f32.mrb[0].mxu0
        %v930 = vadd.f32 %v882, %v929
        %v931 = vpop.f32.mrb[0].mxu0
        %932 = vmatprep.mubr.bf16.mxu0 0
        %933 = vmatmul.mubr.bf16.gmra.mrb[0].mxu0 %v815
        %v934 = vpop.f32.mrb[0].mxu0
        %v935 = vadd.f32 %v882, %v934
        %v936 = vpop.f32.mrb[0].mxu0
        %v937 = vpop.f32.mrb[0].mxu0
        %v938 = vadd.f32 %v882, %v937
        %v939 = vpop.f32.mrb[0].mxu0
        %940 = vmatprep.mubr.bf16.mxu0 0
        %941 = vmatmul.mubr.bf16.gmra.mrb[0].mxu0 %v816
        %v942 = vpop.f32.mrb[0].mxu0
        %v943 = vadd.f32 %v882, %v942
        %v944 = vpop.f32.mrb[0].mxu0
        %v945 = vpop.f32.mrb[0].mxu0
        %v946 = vadd.f32 %v882, %v945
        %v947 = vpop.f32.mrb[0].mxu0
        %948 = vmatprep.mubr.bf16.mxu0 0
        %949 = vmatmul.mubr.bf16.gmra.mrb[0].mxu0 %v817
        %v950 = vpop.f32.mrb[0].mxu0
        %v951 = vadd.f32 %v882, %v950
        %v952 = vpop.f32.mrb[0].mxu0
        %v953 = vpop.f32.mrb[0].mxu0
        %v954 = vadd.f32 %v882, %v953
        %v955 = vpop.f32.mrb[0].mxu0
        %956 = vmatprep.mubr.bf16.mxu0 0
        %957 = vmatmul.mubr.bf16.gmra.mrb[0].mxu0 %v818
        %v958 = vpop.f32.mrb[0].mxu0
        %v959 = vadd.f32 %v882, %v958
        %v960 = vpop.f32.mrb[0].mxu0
        %v961 = vpop.f32.mrb[0].mxu0
        %v962 = vadd.f32 %v882, %v961
        %v963 = vpop.f32.mrb[0].mxu0
        %964 = vmatprep.mubr.bf16.mxu0 0
        %965 = vmatmul.mubr.bf16.gmra.mrb[0].mxu0 %v819
        %v966 = vpop.f32.mrb[0].mxu0
        %v967 = vadd.f32 %v882, %v966
        %v968 = vpop.f32.mrb[0].mxu0
        %v969 = vpop.f32.mrb[0].mxu0
        %v970 = vadd.f32 %v882, %v969
        %v971 = vpop.f32.mrb[0].mxu0
        %972 = vmatprep.mubr.bf16.mxu0 0
        %973 = vmatmul.mubr.bf16.gmra.mrb[0].mxu0 %v820
        %v974 = vpop.f32.mrb[0].mxu0
        %v975 = vadd.f32 %v882, %v974
        %v976 = vpop.f32.mrb[0].mxu0
        %v977 = vpop.f32.mrb[0].mxu0
        %v978 = vadd.f32 %v882, %v977
        %v979 = vpop.f32.mrb[0].mxu0
        %980 = vdwg.mxu0
        %v981 = vmax.f32 %v919, 0.0
        %v982 = vmax.f32 %v922, 0.0
        %v983 = vmax.f32 %v927, 0.0
        %v984 = vmax.f32 %v930, 0.0
        %v985 = vmax.f32 %v935, 0.0
        %v986 = vmax.f32 %v938, 0.0
        %v987 = vmax.f32 %v943, 0.0
        %v988 = vmax.f32 %v946, 0.0
        %v989 = vmax.f32 %v951, 0.0
        %v990 = vmax.f32 %v954, 0.0
        %v991 = vmax.f32 %v959, 0.0
        %v992 = vmax.f32 %v962, 0.0
        %v993 = vmax.f32 %v967, 0.0
        %v994 = vmax.f32 %v970, 0.0
        %v995 = vmax.f32 %v975, 0.0
        %v996 = vmax.f32 %v978, 0.0
        %998 = vset.pattern.permute.xlu0 0
        %999 = vperm.xlu0 %998, %v861
        %v1000 = vpop.permute.xlu0 %999
        %1003 = vset.pattern.permute.xlu0 0
        %1004 = vperm.xlu0 %1003, %v862
        %v1005 = vpop.permute.xlu0 %1004
        %1008 = vset.pattern.permute.xlu0 0
        %1009 = vperm.xlu0 %1008, %v863
        %v1010 = vpop.permute.xlu0 %1009
        %1013 = vset.pattern.permute.xlu0 0
        %1014 = vperm.xlu0 %1013, %v864
        %v1015 = vpop.permute.xlu0 %1014
        %1018 = vset.pattern.permute.xlu0 0
        %1019 = vperm.xlu0 %1018, %v865
        %v1020 = vpop.permute.xlu0 %1019
        %1023 = vset.pattern.permute.xlu0 0
        %1024 = vperm.xlu0 %1023, %v866
        %v1025 = vpop.permute.xlu0 %1024
        %1028 = vset.pattern.permute.xlu0 0
        %1029 = vperm.xlu0 %1028, %v867
        %v1030 = vpop.permute.xlu0 %1029
        %1033 = vset.pattern.permute.xlu0 0
        %1034 = vperm.xlu0 %1033, %v868
        %v1035 = vpop.permute.xlu0 %1034
        %1038 = vset.pattern.permute.xlu0 0
        %1039 = vperm.xlu0 %1038, %v869
        %v1040 = vpop.permute.xlu0 %1039
        %1043 = vset.pattern.permute.xlu0 0
        %1044 = vperm.xlu0 %1043, %v870
        %v1045 = vpop.permute.xlu0 %1044
        %1048 = vset.pattern.permute.xlu0 0
        %1049 = vperm.xlu0 %1048, %v871
        %v1050 = vpop.permute.xlu0 %1049
        %1053 = vset.pattern.permute.xlu0 0
        %1054 = vperm.xlu0 %1053, %v872
        %v1055 = vpop.permute.xlu0 %1054
        %1058 = vset.pattern.permute.xlu0 0
        %1059 = vperm.xlu0 %1058, %v873
        %v1060 = vpop.permute.xlu0 %1059
        %1063 = vset.pattern.permute.xlu0 0
        %1064 = vperm.xlu0 %1063, %v874
        %v1065 = vpop.permute.xlu0 %1064
        %1068 = vset.pattern.permute.xlu0 0
        %1069 = vperm.xlu0 %1068, %v875
        %v1070 = vpop.permute.xlu0 %1069
        %1073 = vset.pattern.permute.xlu0 0
        %1074 = vperm.xlu0 %1073, %v876
        %v1075 = vpop.permute.xlu0 %1074
        %v1077 = vmul.f32 %v981, %v1000
        %v1078 = vmul.f32 %v982, %v1005
        %v1079 = vmul.f32 %v983, %v1010
        %v1080 = vmul.f32 %v984, %v1015
        %v1081 = vmul.f32 %v985, %v1020
        %v1082 = vmul.f32 %v986, %v1025
        %v1083 = vmul.f32 %v987, %v1030
        %v1084 = vmul.f32 %v988, %v1035
        %v1085 = vmul.f32 %v989, %v1040
        %v1086 = vmul.f32 %v990, %v1045
        %v1087 = vmul.f32 %v991, %v1050
        %v1088 = vmul.f32 %v992, %v1055
        %v1089 = vmul.f32 %v993, %v1060
        %v1090 = vmul.f32 %v994, %v1065
        %v1091 = vmul.f32 %v995, %v1070
        %v1092 = vmul.f32 %v996, %v1075
        %v1093 = vpack.c.bf16 %v1078, %v1077
        %v1094 = vpack.c.bf16 %v1080, %v1079
        %v1095 = vpack.c.bf16 %v1082, %v1081
        %v1096 = vpack.c.bf16 %v1084, %v1083
        %v1097 = vpack.c.bf16 %v1086, %v1085
        %v1098 = vpack.c.bf16 %v1088, %v1087
        %v1099 = vpack.c.bf16 %v1090, %v1089
        %v1100 = vpack.c.bf16 %v1092, %v1091
        %s1101 = smul.u32 %s24, 128
        %p1102 = scmp.eq.s32.totalorder %s364, 0
        // Predicated region
        $region57: #{tpu_custom_call.1} parent=47 // pred_check
          %p1103 = pneg %p1102
        $region58: #{tpu_custom_call.1} parent=47 // pred_check_branch
          %1105 = sbr.rel (%p1103) target = $region60
        $region59: #{tpu_custom_call.1} parent=47 // pred_region
          %s1106 = sshra.s32 %s1101, 4
          %s1107 = sand.u32 %s1101, 15
          %s1108 = smul.addr %s1106, 8
          %s1109 = scalar_lea.vmem [#allocation3], %s1108
          %vm1110 = vcmask 523264
          %1111 = vst.msk [vmem:[%s1109] sm:$0xff] %vm1110, %v1093
          %1112 = vst.msk [vmem:[%s1109 + $0x8] sm:$0xff] %vm1110, %v1094
          %1113 = vst.msk [vmem:[%s1109 + $0x10] sm:$0xff] %vm1110, %v1095
          %1114 = vst.msk [vmem:[%s1109 + $0x18] sm:$0xff] %vm1110, %v1096
          %1115 = vst.msk [vmem:[%s1109 + $0x20] sm:$0xff] %vm1110, %v1097
          %1116 = vst.msk [vmem:[%s1109 + $0x28] sm:$0xff] %vm1110, %v1098
          %1117 = vst.msk [vmem:[%s1109 + $0x30] sm:$0xff] %vm1110, %v1099
          %1118 = vst.msk [vmem:[%s1109 + $0x38] sm:$0xff] %vm1110, %v1100
        $region60: #{tpu_custom_call.1} parent=47 // pred_fallthru
          _
        %p1119 = scmp.eq.s32.totalorder %s364, 1
        // Predicated region
        $region61: #{tpu_custom_call.1} parent=47 // pred_check
          %p1120 = pneg %p1119
        $region62: #{tpu_custom_call.1} parent=47 // pred_check_branch
          %1122 = sbr.rel (%p1120) target = $region64
        $region63: #{tpu_custom_call.1} parent=47 // pred_region
          %s1123 = sshra.s32 %s1101, 4
          %s1124 = sand.u32 %s1101, 15
          %s1125 = smul.addr %s1123, 8
          %s1126 = scalar_lea.vmem [#allocation2], %s1125
          %vm1127 = vcmask 523264
          %1128 = vst.msk [vmem:[%s1126] sm:$0xff] %vm1127, %v1093
          %1129 = vst.msk [vmem:[%s1126 + $0x8] sm:$0xff] %vm1127, %v1094
          %1130 = vst.msk [vmem:[%s1126 + $0x10] sm:$0xff] %vm1127, %v1095
          %1131 = vst.msk [vmem:[%s1126 + $0x18] sm:$0xff] %vm1127, %v1096
          %1132 = vst.msk [vmem:[%s1126 + $0x20] sm:$0xff] %vm1127, %v1097
          %1133 = vst.msk [vmem:[%s1126 + $0x28] sm:$0xff] %vm1127, %v1098
          %1134 = vst.msk [vmem:[%s1126 + $0x30] sm:$0xff] %vm1127, %v1099
          %1135 = vst.msk [vmem:[%s1126 + $0x38] sm:$0xff] %vm1127, %v1100
        $region64: #{tpu_custom_call.1} parent=47 // pred_fallthru
          _
        %p1136 = pnand %p365, %p367
        %p1137 = pneg %p1136
        // Predicated region
        $region65: #{tpu_custom_call.1} parent=47 // pred_check
          _
        $region66: #{tpu_custom_call.1} parent=47 // pred_check_branch
          %1139 = sbr.rel (%p1136) target = $region68
        $region67: #{tpu_custom_call.1} parent=47 // pred_region
          %vm1140 = vcmask 523264
          %1141 = vst.msk [vmem:[#allocation5] sm:$0xff] %vm1140, 0.0
        $region68: #{tpu_custom_call.1} parent=47 // pred_fallthru
          _
        // Predicated region
        $region69: #{tpu_custom_call.1} parent=47 // pred_check
          %p1142 = pneg %p365
        $region70: #{tpu_custom_call.1} parent=47 // pred_check_branch
          %1144 = sbr.rel (%p1142) target = $region72
        $region71: #{tpu_custom_call.1} parent=47 // pred_region
          %v1145 = vld [vmem:[#allocation5] sm:$0xff]
          %v1146 = vld [vmem:[%s343] sm:$0xf]
          %1147 = vmatprep.subr.bf16.mxu0 0
          %1148 = vmatpush1.bf16.msra.mxu0 %v1093
          %1149 = vmatprep.subr.bf16.mxu0 0
          %1150 = vmatpush1.bf16.msra.mxu0 %v1094
          %1151 = vmatprep.subr.bf16.mxu0 0
          %1152 = vmatpush1.bf16.msra.mxu0 %v1095
          %1153 = vmatprep.subr.bf16.mxu0 0
          %1154 = vmatpush1.bf16.msra.mxu0 %v1096
          %1155 = vmatprep.subr.bf16.mxu0 0
          %1156 = vmatpush1.bf16.msra.mxu0 %v1097
          %1157 = vmatprep.subr.bf16.mxu0 0
          %1158 = vmatpush1.bf16.msra.mxu0 %v1098
          %1159 = vmatprep.subr.bf16.mxu0 0
          %1160 = vmatpush1.bf16.msra.mxu0 %v1099
          %1161 = vmatprep.subr.bf16.mxu0 0
          %1162 = vmatpush1.bf16.msra.mxu0 %v1100
          %1163 = vmatprep.subr.bf16.mxu0 0
          %1164 = vmatpush1.bf16.msra.mxu0 0
          %1165 = vmatprep.subr.bf16.mxu0 0
          %1166 = vmatpush1.bf16.msra.mxu0 0
          %1167 = vmatprep.subr.bf16.mxu0 0
          %1168 = vmatpush1.bf16.msra.mxu0 0
          %1169 = vmatprep.subr.bf16.mxu0 0
          %1170 = vmatpush1.bf16.msra.mxu0 0
          %1171 = vmatprep.subr.bf16.mxu0 0
          %1172 = vmatpush1.bf16.msra.mxu0 0
          %1173 = vmatprep.subr.bf16.mxu0 0
          %1174 = vmatpush1.bf16.msra.mxu0 0
          %1175 = vmatprep.subr.bf16.mxu0 0
          %1176 = vmatpush1.bf16.msra.mxu0 0
          %1177 = vmatprep.subr.bf16.mxu0 0
          %1178 = vmatpush1.bf16.msra.mxu0 0
          %1179 = vmatprep.mubr.bf16.mxu0 0
          %1180 = vmatmul.mubr.bf16.gmra.mrb[0].mxu0 %v1146
          %v1181 = vpop.f32.mrb[0].mxu0
          %v1182 = vadd.f32 0.0, %v1181
          %v1183 = vpop.f32.mrb[0].mxu0
          %v1184 = vpop.f32.mrb[0].mxu0
          %v1185 = vpop.f32.mrb[0].mxu0
          %1186 = vdwg.mxu0
          %v1187 = vadd.f32 %v1145, %v1182
          %vm1188 = vcmask 523264
          %1189 = vst.msk [vmem:[#allocation5] sm:$0xff] %vm1188, %v1187
        $region72: #{tpu_custom_call.1} parent=47 // pred_fallthru
          _
        // Predicated region
        $region73: #{tpu_custom_call.1} parent=47 // pred_check
          %p1190 = pneg %p216
        $region74: #{tpu_custom_call.1} parent=47 // pred_check_branch
          %1192 = sbr.rel (%p1190) target = $region76
        $region75: #{tpu_custom_call.1} parent=47 // pred_region
          %s1194 = ssub.s32 128, 128
          %1195 = vsyncadd [#allocation6], %s1194
          %s1197 = sshll.u32 [#allocation5], 4
          %s1198 = int_to_ptr.vmem [resolvable:$true] %s1197
          %1200 = dma.vmem_to_hbm [thread:$0]  %s1198, 128, %s7, [#allocation6]
        $region76: #{tpu_custom_call.1} parent=47 // pred_fallthru
          _
        // Predicated region
        $region77: #{tpu_custom_call.1} parent=47 // pred_check
          %p1201 = pneg %p216
        $region78: #{tpu_custom_call.1} parent=47 // pred_check_branch
          %1203 = sbr.rel (%p1201) target = $region80
        $region79: #{tpu_custom_call.1} parent=47 // pred_region
          %1204 = dma.done [#allocation6], 128
        $region80: #{tpu_custom_call.1} parent=47 // pred_fallthru
          _
      $region48: #{tpu_custom_call.1} parent=5 // pred_fallthru
        _
      %p1205 = scmp.le.s32.totalorder 2, %s14
      // Predicated region
      $region81: #{tpu_custom_call.1} parent=5 // pred_check
        %p1206 = pneg %p1205
      $region82: #{tpu_custom_call.1} parent=5 // pred_check_branch
        %1208 = sbr.rel (%p1206) target = $region84
      $region83: #{tpu_custom_call.1} parent=5 // pred_region
        %s1209 = ssub.s32 %s14, 2
      $region84: #{tpu_custom_call.1} parent=5 // pred_fallthru
        _
    $region6: #{tpu_custom_call.1} parent=1 // loop_footer
      %s18 = sadd.s32 1, %s14
    $region7: #{tpu_custom_call.1} parent=1 // loop_footer_branch
      %13 = sbr.rel target = $region3
    $region8: #{tpu_custom_call.1} parent=1 // loop_exit
      _
    %1210 = vsyncpa [#allocation6], 1
    %s1211 = scalar_lea.sflag [#allocation6], 1
    %1212 = vsyncpa %s1211, 1

</llo_original>
